<compile_context>
chip_gen: v6e
topology: v6e:2x2x1
jax: 0.10.0
libtpu: 0.0.40
codegen_flags: <defaults>
</compile_context>

<pallas_src>
import jax
import jax.numpy as jnp
from jax.experimental import pallas as pl
from jax.experimental.pallas import tpu as pltpu


def _round_up(x, m):
    return (x + m - 1) // m * m


def _delsum_kernel(toks_ref, table_ref, out_ref, acc_ref):
    # toks_ref:  (1, TN, Q)       int32   (per batch/N-tile block)
    # table_ref: (Q, Cpad, Wpad)  bf16/f32 (all quantizer tables, VMEM-resident)
    # out_ref:   (1, TN, Wpad)    out dtype
    # acc_ref:   (TN, Wpad)       f32 scratch accumulator
    tn = toks_ref.shape[1]
    n_q = toks_ref.shape[2]
    cpad = table_ref.shape[1]

    tok_block = toks_ref[0]  # (TN, Q) int32, loaded once
    q_iota = jax.lax.broadcasted_iota(jnp.int32, (tn, n_q), 1)   # hoisted out of loop
    iota_c = jax.lax.broadcasted_iota(jnp.int32, (tn, cpad), 1)  # hoisted out of loop

    # Static unroll over quantizers (Q is small, <= 8): full LLO visibility, all dots
    # accumulate into the same f32 VMEM scratch.
    for q in range(n_q):
        # q-th token column as a sublane-major (TN, 1) vector via masked reduce over the
        # tiny Q lane dim (avoids a lane->sublane transpose).
        ids = jnp.sum(jnp.where(q_iota == q, tok_block, 0), axis=1, keepdims=True)
        # One-hot gather expressed as an MXU matmul.  Tokens outside [0, C) hit
        # zero-padded rows / never match and contribute zero.
        one_hot = (ids == iota_c).astype(table_ref.dtype)  # (TN, Cpad), 0/1 exact in bf16
        part = jnp.dot(one_hot, table_ref[q], preferred_element_type=jnp.float32)
        if q == 0:
            acc_ref[...] = part
        else:
            acc_ref[...] += part

    out_ref[0] = acc_ref[...].astype(out_ref.dtype)


def del_sum_embedding(toks, tables, out_dtype=jnp.float32, length=2250,
                      table_dtype=jnp.bfloat16, tile_n=256):
    """toks: (B, Q, N) int; tables: (Q, codes+special, W) float32.

    table_dtype: MXU operand dtype for the gather-matmul.  bf16 (default) halves table
    VMEM/HBM footprint and uses the fast MXU path; values are rounded to bf16.  Use
    jnp.float32 for bit-exact parity with the f32 PyTorch embedding tables.
    """
    b, q, n = toks.shape
    newn = min(n, length)
    toks = toks[:, :, :newn]
    _, c, w = tables.shape

    cpad = _round_up(c, 128)
    wpad = _round_up(w, 128)
    tn = min(_round_up(tile_n, 8), _round_up(newn, 8))
    npad = _round_up(newn, tn)

    # Pad tables to clean MXU shapes (zero rows/cols are never selected / add zero).
    tables_p = jnp.zeros((q, cpad, wpad), table_dtype)
    tables_p = tables_p.at[:, :c, :w].set(tables.astype(table_dtype))

    # Tokens -> (B, Npad, Q): per-quantizer id columns are sublane-major inside the kernel.
    toks_t = jnp.zeros((b, npad, q), jnp.int32)
    toks_t = toks_t.at[:, :newn, :].set(
        jnp.transpose(toks.astype(jnp.int32), (0, 2, 1)))

    grid = (b, npad // tn)
    out_bytes = b * npad * wpad * jnp.dtype(out_dtype).itemsize
    tab_bytes = tables_p.size * jnp.dtype(table_dtype).itemsize
    tok_bytes = toks_t.size * 4

    out = pl.pallas_call(
        _delsum_kernel,
        out_shape=jax.ShapeDtypeStruct((b, npad, wpad), out_dtype),
        grid_spec=pltpu.PrefetchScalarGridSpec(
            num_scalar_prefetch=0,
            grid=grid,
            in_specs=[
                # Token tile per (batch, N-tile).
                pl.BlockSpec((1, tn, q), lambda bi, ni: (bi, ni, 0)),
                # Full stacked table: constant block index -> fetched once, stays resident.
                pl.BlockSpec((q, cpad, wpad), lambda bi, ni: (0, 0, 0)),
            ],
            out_specs=pl.BlockSpec((1, tn, wpad), lambda bi, ni: (bi, ni, 0)),
            scratch_shapes=[pltpu.VMEM((tn, wpad), jnp.float32)],
        ),
        compiler_params=pltpu.CompilerParams(
            dimension_semantics=("parallel", "parallel"),
            vmem_limit_bytes=64 * 1024 * 1024,
        ),
        cost_estimate=pl.CostEstimate(
            flops=2 * b * npad * q * cpad * wpad,
            transcendentals=0,
            bytes_accessed=tab_bytes + tok_bytes + out_bytes,
        ),
    )(toks_t, tables_p)

    # Drop N / W padding (layout plumbing only).
    return out[:, :newn, :w]


def make_params(key, quantizers, codes, special_codes, width):
    """Deterministic synthetic FlexEmbeddings tables (no checkpoint load)."""
    keys = jax.random.split(key, quantizers + 1)
    special = jax.random.normal(keys[0], (special_codes, width), jnp.float32) * 0.02
    mains = [
        jax.random.normal(keys[1 + i], (codes, width), jnp.float32) * 0.02
        for i in range(quantizers)
    ]
    # Combined per-quantizer table: rows [0, codes) = main_q, rows [codes, codes+S) = shared special.
    tables = jnp.stack([jnp.concatenate([m, special], axis=0) for m in mains], axis=0)
    return tables  # (Q, codes+special, width)


if __name__ == "__main__":
    # Small shapes consistent with the module: width = n_head * head_width.
    B = 2
    N_HEAD, HEAD_WIDTH = 2, 16
    WIDTH = N_HEAD * HEAD_WIDTH          # 32
    QUANTIZERS = 4
    CODES = 32
    SPECIAL = 2
    SEQ = 8
    LENGTH = 2250

    key = jax.random.PRNGKey(0)
    k_tab, k_tok = jax.random.split(key)

    tables = make_params(k_tab, QUANTIZERS, CODES, SPECIAL, WIDTH)
    # Tokens include both normal ([0, CODES)) and special ([CODES, CODES+SPECIAL)) codes.
    toks = jax.random.randint(k_tok, (B, QUANTIZERS, SEQ), 0, CODES + SPECIAL, dtype=jnp.int32)

    # --- Fast bf16-table path (default). The one-hot matmul selects exactly one table row,
    #     so the result equals gathering bf16-rounded tables and summing in f32. ---
    out_bf16 = jax.block_until_ready(
        del_sum_embedding(toks, tables, out_dtype=jnp.float32, length=LENGTH))
    tab_q = tables.astype(jnp.bfloat16).astype(jnp.float32)
    ref_bf16 = jnp.zeros((B, SEQ, WIDTH), jnp.float32)
    for qi in range(QUANTIZERS):
        ref_bf16 = ref_bf16 + tab_q[qi][toks[:, qi, :]]
    assert out_bf16.shape == (B, SEQ, WIDTH)
    assert jnp.allclose(out_bf16, ref_bf16, atol=1e-6, rtol=1e-6)

    # --- Exact f32 path (bit-parity with the PyTorch module's f32 tables). ---
    out_f32 = jax.block_until_ready(
        del_sum_embedding(toks, tables, out_dtype=jnp.float32, length=LENGTH,
                          table_dtype=jnp.float32))
    ref_f32 = jnp.zeros((B, SEQ, WIDTH), jnp.float32)
    for qi in range(QUANTIZERS):
        ref_f32 = ref_f32 + tables[qi][toks[:, qi, :]]
    assert jnp.allclose(out_f32, ref_f32, atol=1e-5, rtol=1e-5)

    print("KERNEL_OK")
</pallas_src>

<mosaic_0001>
module attributes {stable_mosaic.version = 11 : i64} {
  func.func @_delsum_kernel(%arg0: i32, %arg1: i32, %arg2: memref<1x8x4xi32, #tpu.memory_space<vmem>>, %arg3: memref<4x128x128xbf16, #tpu.memory_space<vmem>>, %arg4: memref<1x8x128xf32, #tpu.memory_space<vmem>>, %arg5: memref<8x128xf32, #tpu.memory_space<vmem>>) attributes {dimension_semantics = [#tpu.dimension_semantics<parallel>, #tpu.dimension_semantics<parallel>], iteration_bounds = array<i64: 2, 1>, scalar_prefetch = 0 : i64, scratch_operands = 1 : i64, tpu.core_type = #tpu.core_type<tc>, window_params = [{transform_indices = @transform_0, window_bounds = array<i64: 1, 8, 4>}, {pipeline_mode = #tpu.pipeline_mode<synchronous>, transform_indices = @transform_1, window_bounds = array<i64: 4, 128, 128>}, {transform_indices = @transform_2, window_bounds = array<i64: 1, 8, 128>}]} {
    %c0 = arith.constant 0 : index
    %c0_0 = arith.constant 0 : index
    %c0_1 = arith.constant 0 : index
    %0 = vector.load %arg2[%c0, %c0_0, %c0_1] : memref<1x8x4xi32, #tpu.memory_space<vmem>>, vector<1x8x4xi32>
    %1 = vector.shape_cast %0 : vector<1x8x4xi32> to vector<8x4xi32>
    %2 = tpu.iota {dimensions = array<i32: 1>} : vector<8x4xi32>
    %3 = tpu.iota {dimensions = array<i32: 1>} : vector<8x128xi32>
    %c0_i32 = arith.constant 0 : i32
    %4 = vector.broadcast %c0_i32 : i32 to vector<8x4xi32>
    %5 = arith.cmpi eq, %2, %4 : vector<8x4xi32>
    %c0_i32_2 = arith.constant 0 : i32
    %6 = vector.broadcast %c0_i32_2 : i32 to vector<8x4xi32>
    %7 = arith.select %5, %1, %6 : vector<8x4xi1>, vector<8x4xi32>
    %cst = arith.constant dense<0> : vector<8xi32>
    %8 = vector.multi_reduction <add>, %7, %cst [1] : vector<8x4xi32> to vector<8xi32>
    %9 = vector.shape_cast %8 : vector<8xi32> to vector<8x1xi32>
    %10 = vector.broadcast %9 : vector<8x1xi32> to vector<8x128xi32>
    %11 = arith.cmpi eq, %10, %3 : vector<8x128xi32>
    %12 = arith.extui %11 : vector<8x128xi1> to vector<8x128xi32>
    %13 = arith.sitofp %12 : vector<8x128xi32> to vector<8x128xf32>
    %14 = arith.truncf %13 : vector<8x128xf32> to vector<8x128xbf16>
    %c0_3 = arith.constant 0 : index
    %c0_4 = arith.constant 0 : index
    %c0_5 = arith.constant 0 : index
    %15 = vector.load %arg3[%c0_3, %c0_4, %c0_5] : memref<4x128x128xbf16, #tpu.memory_space<vmem>>, vector<1x128x128xbf16>
    %16 = vector.shape_cast %15 : vector<1x128x128xbf16> to vector<128x128xbf16>
    %cst_6 = arith.constant dense<0.000000e+00> : vector<8x128xf32>
    %17 = tpu.matmul %14, %16, %cst_6 {dimension_numbers = #tpu.dot_dimension_numbers<[1], [0], [0], [1], [0, 0, 1, 1], [], []>} : vector<8x128xbf16>, vector<128x128xbf16>, vector<8x128xf32> -> vector<8x128xf32>
    %c0_7 = arith.constant 0 : index
    %c0_8 = arith.constant 0 : index
    %18 = vector.load %arg5[%c0_7, %c0_8] : memref<8x128xf32, #tpu.memory_space<vmem>>, vector<8x128xf32>
    tpu.vector_store %arg5[%c0_7, %c0_8], %17 {strides = array<i32>} : memref<8x128xf32, #tpu.memory_space<vmem>>, vector<8x128xf32>,
    %c1_i32 = arith.constant 1 : i32
    %19 = vector.broadcast %c1_i32 : i32 to vector<8x4xi32>
    %20 = arith.cmpi eq, %2, %19 : vector<8x4xi32>
    %c0_i32_9 = arith.constant 0 : i32
    %21 = vector.broadcast %c0_i32_9 : i32 to vector<8x4xi32>
    %22 = arith.select %20, %1, %21 : vector<8x4xi1>, vector<8x4xi32>
    %cst_10 = arith.constant dense<0> : vector<8xi32>
    %23 = vector.multi_reduction <add>, %22, %cst_10 [1] : vector<8x4xi32> to vector<8xi32>
    %24 = vector.shape_cast %23 : vector<8xi32> to vector<8x1xi32>
    %25 = vector.broadcast %24 : vector<8x1xi32> to vector<8x128xi32>
    %26 = arith.cmpi eq, %25, %3 : vector<8x128xi32>
    %27 = arith.extui %26 : vector<8x128xi1> to vector<8x128xi32>
    %28 = arith.sitofp %27 : vector<8x128xi32> to vector<8x128xf32>
    %29 = arith.truncf %28 : vector<8x128xf32> to vector<8x128xbf16>
    %c1 = arith.constant 1 : index
    %c0_11 = arith.constant 0 : index
    %c0_12 = arith.constant 0 : index
    %30 = vector.load %arg3[%c1, %c0_11, %c0_12] : memref<4x128x128xbf16, #tpu.memory_space<vmem>>, vector<1x128x128xbf16>
    %31 = vector.shape_cast %30 : vector<1x128x128xbf16> to vector<128x128xbf16>
    %cst_13 = arith.constant dense<0.000000e+00> : vector<8x128xf32>
    %32 = tpu.matmul %29, %31, %cst_13 {dimension_numbers = #tpu.dot_dimension_numbers<[1], [0], [0], [1], [0, 0, 1, 1], [], []>} : vector<8x128xbf16>, vector<128x128xbf16>, vector<8x128xf32> -> vector<8x128xf32>
    %c0_14 = arith.constant 0 : index
    %c0_15 = arith.constant 0 : index
    %33 = vector.load %arg5[%c0_14, %c0_15] : memref<8x128xf32, #tpu.memory_space<vmem>>, vector<8x128xf32>
    %34 = arith.addf %33, %32 : vector<8x128xf32>
    %c0_16 = arith.constant 0 : index
    %c0_17 = arith.constant 0 : index
    %35 = vector.load %arg5[%c0_16, %c0_17] : memref<8x128xf32, #tpu.memory_space<vmem>>, vector<8x128xf32>
    tpu.vector_store %arg5[%c0_16, %c0_17], %34 {strides = array<i32>} : memref<8x128xf32, #tpu.memory_space<vmem>>, vector<8x128xf32>,
    %c2_i32 = arith.constant 2 : i32
    %36 = vector.broadcast %c2_i32 : i32 to vector<8x4xi32>
    %37 = arith.cmpi eq, %2, %36 : vector<8x4xi32>
    %c0_i32_18 = arith.constant 0 : i32
    %38 = vector.broadcast %c0_i32_18 : i32 to vector<8x4xi32>
    %39 = arith.select %37, %1, %38 : vector<8x4xi1>, vector<8x4xi32>
    %cst_19 = arith.constant dense<0> : vector<8xi32>
    %40 = vector.multi_reduction <add>, %39, %cst_19 [1] : vector<8x4xi32> to vector<8xi32>
    %41 = vector.shape_cast %40 : vector<8xi32> to vector<8x1xi32>
    %42 = vector.broadcast %41 : vector<8x1xi32> to vector<8x128xi32>
    %43 = arith.cmpi eq, %42, %3 : vector<8x128xi32>
    %44 = arith.extui %43 : vector<8x128xi1> to vector<8x128xi32>
    %45 = arith.sitofp %44 : vector<8x128xi32> to vector<8x128xf32>
    %46 = arith.truncf %45 : vector<8x128xf32> to vector<8x128xbf16>
    %c2 = arith.constant 2 : index
    %c0_20 = arith.constant 0 : index
    %c0_21 = arith.constant 0 : index
    %47 = vector.load %arg3[%c2, %c0_20, %c0_21] : memref<4x128x128xbf16, #tpu.memory_space<vmem>>, vector<1x128x128xbf16>
    %48 = vector.shape_cast %47 : vector<1x128x128xbf16> to vector<128x128xbf16>
    %cst_22 = arith.constant dense<0.000000e+00> : vector<8x128xf32>
    %49 = tpu.matmul %46, %48, %cst_22 {dimension_numbers = #tpu.dot_dimension_numbers<[1], [0], [0], [1], [0, 0, 1, 1], [], []>} : vector<8x128xbf16>, vector<128x128xbf16>, vector<8x128xf32> -> vector<8x128xf32>
    %c0_23 = arith.constant 0 : index
    %c0_24 = arith.constant 0 : index
    %50 = vector.load %arg5[%c0_23, %c0_24] : memref<8x128xf32, #tpu.memory_space<vmem>>, vector<8x128xf32>
    %51 = arith.addf %50, %49 : vector<8x128xf32>
    %c0_25 = arith.constant 0 : index
    %c0_26 = arith.constant 0 : index
    %52 = vector.load %arg5[%c0_25, %c0_26] : memref<8x128xf32, #tpu.memory_space<vmem>>, vector<8x128xf32>
    tpu.vector_store %arg5[%c0_25, %c0_26], %51 {strides = array<i32>} : memref<8x128xf32, #tpu.memory_space<vmem>>, vector<8x128xf32>,
    %c3_i32 = arith.constant 3 : i32
    %53 = vector.broadcast %c3_i32 : i32 to vector<8x4xi32>
    %54 = arith.cmpi eq, %2, %53 : vector<8x4xi32>
    %c0_i32_27 = arith.constant 0 : i32
    %55 = vector.broadcast %c0_i32_27 : i32 to vector<8x4xi32>
    %56 = arith.select %54, %1, %55 : vector<8x4xi1>, vector<8x4xi32>
    %cst_28 = arith.constant dense<0> : vector<8xi32>
    %57 = vector.multi_reduction <add>, %56, %cst_28 [1] : vector<8x4xi32> to vector<8xi32>
    %58 = vector.shape_cast %57 : vector<8xi32> to vector<8x1xi32>
    %59 = vector.broadcast %58 : vector<8x1xi32> to vector<8x128xi32>
    %60 = arith.cmpi eq, %59, %3 : vector<8x128xi32>
    %61 = arith.extui %60 : vector<8x128xi1> to vector<8x128xi32>
    %62 = arith.sitofp %61 : vector<8x128xi32> to vector<8x128xf32>
    %63 = arith.truncf %62 : vector<8x128xf32> to vector<8x128xbf16>
    %c3 = arith.constant 3 : index
    %c0_29 = arith.constant 0 : index
    %c0_30 = arith.constant 0 : index
    %64 = vector.load %arg3[%c3, %c0_29, %c0_30] : memref<4x128x128xbf16, #tpu.memory_space<vmem>>, vector<1x128x128xbf16>
    %65 = vector.shape_cast %64 : vector<1x128x128xbf16> to vector<128x128xbf16>
    %cst_31 = arith.constant dense<0.000000e+00> : vector<8x128xf32>
    %66 = tpu.matmul %63, %65, %cst_31 {dimension_numbers = #tpu.dot_dimension_numbers<[1], [0], [0], [1], [0, 0, 1, 1], [], []>} : vector<8x128xbf16>, vector<128x128xbf16>, vector<8x128xf32> -> vector<8x128xf32>
    %c0_32 = arith.constant 0 : index
    %c0_33 = arith.constant 0 : index
    %67 = vector.load %arg5[%c0_32, %c0_33] : memref<8x128xf32, #tpu.memory_space<vmem>>, vector<8x128xf32>
    %68 = arith.addf %67, %66 : vector<8x128xf32>
    %c0_34 = arith.constant 0 : index
    %c0_35 = arith.constant 0 : index
    %69 = vector.load %arg5[%c0_34, %c0_35] : memref<8x128xf32, #tpu.memory_space<vmem>>, vector<8x128xf32>
    tpu.vector_store %arg5[%c0_34, %c0_35], %68 {strides = array<i32>} : memref<8x128xf32, #tpu.memory_space<vmem>>, vector<8x128xf32>,
    %c0_36 = arith.constant 0 : index
    %c0_37 = arith.constant 0 : index
    %70 = vector.load %arg5[%c0_36, %c0_37] : memref<8x128xf32, #tpu.memory_space<vmem>>, vector<8x128xf32>
    %c0_38 = arith.constant 0 : index
    %c0_39 = arith.constant 0 : index
    %c0_40 = arith.constant 0 : index
    %71 = vector.load %arg4[%c0_38, %c0_39, %c0_40] : memref<1x8x128xf32, #tpu.memory_space<vmem>>, vector<1x8x128xf32>
    %72 = vector.shape_cast %71 : vector<1x8x128xf32> to vector<8x128xf32>
    %73 = vector.shape_cast %70 : vector<8x128xf32> to vector<1x8x128xf32>
    tpu.vector_store %arg4[%c0_38, %c0_39, %c0_40], %73 {strides = array<i32>} : memref<1x8x128xf32, #tpu.memory_space<vmem>>, vector<1x8x128xf32>,
    return
  }
  func.func @transform_0(%arg0: i32, %arg1: i32) -> (i32, i32, i32) {
    %c0_i32 = arith.constant 0 : i32
    %c0_i32_0 = arith.constant 0 : i32
    return %arg0, %arg1, %c0_i32 : i32, i32, i32
  }
  func.func @transform_1(%arg0: i32, %arg1: i32) -> (i32, i32, i32) {
    %c0_i32 = arith.constant 0 : i32
    %c0_i32_0 = arith.constant 0 : i32
    %c0_i32_1 = arith.constant 0 : i32
    %c0_i32_2 = arith.constant 0 : i32
    return %c0_i32, %c0_i32_0, %c0_i32_1 : i32, i32, i32
  }
  func.func @transform_2(%arg0: i32, %arg1: i32) -> (i32, i32, i32) {
    %c0_i32 = arith.constant 0 : i32
    %c0_i32_0 = arith.constant 0 : i32
    return %arg0, %arg1, %c0_i32 : i32, i32, i32
  }
}

</mosaic_0001>

<llo_original>
// kernel: tpu_custom_call.1
$region0: #{tpu_custom_call.1}
  #allocation0 [shape = 'u32[]', space=smem, size = 0x4, offset = 0x4, fixed_abs, tag = 'smem constant byte address 0x4 - core index']
  #allocation1 [shape = 'u32[144,128]{1,0:T(1,128)}', space=vmem, size = 0x12000, scoped, tag = 'internal scratch']
  #allocation2 [shape = 'f32[8,128]{1,0:T(8,128)}', space=vmem, size = 0x1000, scoped, tag = 'scratch operand']
  %s0 = inlined_call_operand.vmem [shape: s32[2,8,4], index: 0, kind: input, shape index: {}]
  %s1 = inlined_call_operand.hbm [shape: bf16[4,128,128], index: 1, kind: input, shape index: {}]
  %s2 = inlined_call_operand.hbm [shape: f32[2,8,128], index: 2, kind: output, shape index: {}]
  %s3 = sld [smem:[#allocation0]]
  $region45: #{tpu_custom_call.1} parent=0
    _
  %s5 = ssub.s32 1, %s3
  %s6 = scalar_select 0, %s5, %s3
  $region1: #{tpu_custom_call.1} parent=0
    #allocation3 [shape = 'u8[131072]{0}', space=vmem, size = 0x20000, scoped, tag = 'input window, operand 1, single buffered']
    #allocation4 [shape = 's32[2]{0}', space=sflag, size = 0x8, scoped, tag = 'scoped memory for tpu_custom_call.1']
    #allocation5 [shape = 's32[2]{0}', space=sflag, size = 0x8, scoped, tag = 'scoped memory for tpu_custom_call.1']
    #allocation6 [shape = 'u8[8192]{0}', space=vmem, size = 0x2000, scoped, tag = 'output window, operand 0']
    %7 = vsyncpa [#allocation4], 0
    %8 = vsyncpa [#allocation5], 0
    %s9 = scalar_lea.sflag [#allocation5], 1
    %10 = vsyncpa %s9, 0
    loop: start=0, step=1, limit=4
    $region2: #{tpu_custom_call.1} parent=1 // loop_pre_header
      _
    $region3: #{tpu_custom_call.1} parent=1 // loop_header
      %s12 = sphi 0, %s16
      %p13 = scmp.ge.s32.totalorder %s12, 4
      %s19 = sphi 0, %s31
      %s20 = sphi 0, %s27
      %s21 = sphi 0, %s19
      %s22 = sphi 0, %s20
      %s23 = sphi 0, %s21
      %s24 = sphi 0, %s22
      %s36 = sphi 0, %s38
      %s39 = sphi 0, %s36
      %s40 = sphi 0, %s39
      %s56 = sphi 0, %s40
      %s60 = sphi 0, %s60
      %s62 = sphi 0, %s60
      %s63 = sphi 0, %s62
      %s77 = sphi 0, %s63
      %s85 = sphi 0, %s87
      %s88 = sphi 0, %s85
      %s89 = sphi 0, %s88
      %s105 = sphi 0, %s89
    $region4: #{tpu_custom_call.1} parent=1 // loop_header_branch
      %15 = sbr.rel (%p13) target = $region8
    $region5: #{tpu_custom_call.1} parent=1 // loop_body
      %s17 = ssub.s32 %s12, 1
      %s18 = ssub.s32 %s12, 2
      %s25 = sadd.s32 1, %s20
      %p26 = scmp.ge.s32.totalorder %s25, 1
      %s27 = scalar_select %p26, 0, %s25
      %s28 = sadd.s32 1, %s19
      %s29 = scalar_select %p26, %s28, %s19
      %p30 = scmp.ge.s32.totalorder %s29, 2
      %s31 = scalar_select %p30, 0, %s29
      %s32 = ssub.s32 %s19, %s31
      %s33 = ssub.s32 %s20, %s27
      %s34 = sor.u32 %s32, %s33
      %p35 = scmp.eq.s32.totalorder %s34, 0
      %s37 = sadd.s32 %s36, 1
      %s38 = scalar_select %p35, %s36, %s37
      %p41 = pneg %p35
      %p42 = scmp.eq.s32.totalorder %s12, 1
      %p43 = por %p41, %p42
      %p44 = scmp.ne.s32.totalorder %s36, %s39
      %p45 = scmp.eq.s32.totalorder %s12, 0
      %p46 = por %p44, %p45
      %p47 = scmp.ne.s32.totalorder %s36, %s39
      %p48 = scmp.eq.s32.totalorder %s17, 1
      %p49 = por %p47, %p48
      %p50 = scmp.ne.s32.totalorder %s39, %s40
      %p51 = scmp.eq.s32.totalorder %s17, 0
      %p52 = por %p50, %p51
      %p53 = scmp.ne.s32.totalorder %s39, %s40
      %p54 = scmp.eq.s32.totalorder %s18, 1
      %p55 = por %p53, %p54
      %p57 = scmp.ne.s32.totalorder %s40, %s56
      %p58 = scmp.eq.s32.totalorder %s18, 0
      %p59 = por %p57, %p58
      %s61 = sadd.s32 %s60, 1
      %p64 = scmp.eq.s32.totalorder %s12, 1
      %p65 = scmp.ne.s32.totalorder %s60, %s62
      %p66 = scmp.eq.s32.totalorder %s12, 0
      %p67 = por %p65, %p66
      %p68 = scmp.ne.s32.totalorder %s60, %s62
      %p69 = scmp.eq.s32.totalorder %s17, 1
      %p70 = por %p68, %p69
      %p71 = scmp.ne.s32.totalorder %s62, %s63
      %p72 = scmp.eq.s32.totalorder %s17, 0
      %p73 = por %p71, %p72
      %p74 = scmp.ne.s32.totalorder %s62, %s63
      %p75 = scmp.eq.s32.totalorder %s18, 1
      %p76 = por %p74, %p75
      %p78 = scmp.ne.s32.totalorder %s63, %s77
      %p79 = scmp.eq.s32.totalorder %s18, 0
      %p80 = por %p78, %p79
      %s81 = ssub.s32 %s19, %s31
      %s82 = ssub.s32 %s20, %s27
      %s83 = sor.u32 %s81, %s82
      %p84 = scmp.eq.s32.totalorder %s83, 0
      %s86 = sadd.s32 %s85, 1
      %s87 = scalar_select %p84, %s85, %s86
      %p90 = pneg %p84
      %p91 = scmp.eq.s32.totalorder %s12, 1
      %p92 = por %p90, %p91
      %p93 = scmp.ne.s32.totalorder %s85, %s88
      %p94 = scmp.eq.s32.totalorder %s12, 0
      %p95 = por %p93, %p94
      %p96 = scmp.ne.s32.totalorder %s85, %s88
      %p97 = scmp.eq.s32.totalorder %s17, 1
      %p98 = por %p96, %p97
      %p99 = scmp.ne.s32.totalorder %s88, %s89
      %p100 = scmp.eq.s32.totalorder %s17, 0
      %p101 = por %p99, %p100
      %p102 = scmp.ne.s32.totalorder %s88, %s89
      %p103 = scmp.eq.s32.totalorder %s18, 1
      %p104 = por %p102, %p103
      %p106 = scmp.ne.s32.totalorder %s89, %s105
      %p107 = scmp.eq.s32.totalorder %s18, 0
      %p108 = por %p106, %p107
      %p109 = scmp.le.s32.totalorder 1, %s12
      %p110 = scmp.lt.s32.totalorder %s12, 3
      %p111 = pnand %p109, %p110
      %p112 = pneg %p111
      // Predicated region
      $region9: #{tpu_custom_call.1} parent=5 // pred_check
        _
      $region10: #{tpu_custom_call.1} parent=5 // pred_check_branch
        %114 = sbr.rel (%p111) target = $region12
      $region11: #{tpu_custom_call.1} parent=5 // pred_region
        %s115 = ssub.s32 %s12, 1
        // Predicated region
        $region13: #{tpu_custom_call.1} parent=11 // pred_check
          %p116 = pneg %p73
        $region14: #{tpu_custom_call.1} parent=11 // pred_check_branch
          %118 = sbr.rel (%p116) target = $region16
        $region15: #{tpu_custom_call.1} parent=11 // pred_region
          %s120 = ssub.s32 4096, 4096
          %121 = vsyncadd [#allocation4], %s120
          %s122 = sshll.u32 [#allocation3], 4
          %s123 = int_to_ptr.vmem [resolvable:$true] %s122
          %128 = dma.hbm_to_vmem [thread:$0]  %s1, 4096, %s123, [#allocation4], 64, 64, 4
        $region16: #{tpu_custom_call.1} parent=11 // pred_fallthru
          _
      $region12: #{tpu_custom_call.1} parent=5 // pred_fallthru
        _
      %p129 = scmp.lt.s32.totalorder %s12, 2
      // Predicated region
      $region17: #{tpu_custom_call.1} parent=5 // pred_check
        %p130 = pneg %p129
      $region18: #{tpu_custom_call.1} parent=5 // pred_check_branch
        %132 = sbr.rel (%p130) target = $region20
      $region19: #{tpu_custom_call.1} parent=5 // pred_region
        // Predicated region
        $region21: #{tpu_custom_call.1} parent=19 // pred_check
          %p133 = pneg %p46
        $region22: #{tpu_custom_call.1} parent=19 // pred_check_branch
          %135 = sbr.rel (%p133) target = $region24
        $region23: #{tpu_custom_call.1} parent=19 // pred_region
          %p136 = scmp.lt.s32.totalorder %s19, 1
          %s137 = scalar_select %p136, %s19, 1
          %p138 = scmp.lt.s32.totalorder %s20, 0
          %s139 = scalar_select %p138, %s20, 0
          %s140 = sadd.s32 %s139, %s137
          %s141 = smul.addr %s140, 8
          %s142 = scalar_lea.vmem %s0, %s141
        $region24: #{tpu_custom_call.1} parent=19 // pred_fallthru
          _
      $region20: #{tpu_custom_call.1} parent=5 // pred_fallthru
        _
      %p143 = scmp.le.s32.totalorder 1, %s12
      %p144 = scmp.lt.s32.totalorder %s12, 3
      %p145 = pnand %p143, %p144
      %p146 = pneg %p145
      // Predicated region
      $region25: #{tpu_custom_call.1} parent=5 // pred_check
        _
      $region26: #{tpu_custom_call.1} parent=5 // pred_check_branch
        %148 = sbr.rel (%p145) target = $region28
      $region27: #{tpu_custom_call.1} parent=5 // pred_region
        %s149 = ssub.s32 %s12, 1
        // Predicated region
        $region29: #{tpu_custom_call.1} parent=27 // pred_check
          %p150 = pneg %p73
        $region30: #{tpu_custom_call.1} parent=27 // pred_check_branch
          %152 = sbr.rel (%p150) target = $region32
        $region31: #{tpu_custom_call.1} parent=27 // pred_region
          %153 = dma.done [#allocation4], 4096
        $region32: #{tpu_custom_call.1} parent=27 // pred_fallthru
          _
        %p154 = scmp.lt.s32.totalorder %s21, 1
        %s155 = scalar_select %p154, %s21, 1
        %p156 = scmp.lt.s32.totalorder %s22, 0
        %s157 = scalar_select %p156, %s22, 0
        %s158 = sadd.s32 %s157, %s155
        %s159 = smul.addr %s158, 8
        %s160 = scalar_lea.vmem %s0, %s159
        %p161 = pneg %p52
        %p162 = pneg %p49
        %p163 = pneg %p73
        %p164 = pneg %p70
        %p165 = pneg %p101
        %p166 = pneg %p98
        %s167 = sand.u32 %s88, 1
        %s168 = scalar_lea.sflag [#allocation5], %s167
        %s169 = sand.u32 %s88, 1
        %s170 = smul.addr %s169, 8
        %s171 = scalar_lea.vmem [#allocation6], %s170
        %p172 = scmp.lt.s32.totalorder %s21, 1
        %s173 = scalar_select %p172, %s21, 1
        %p174 = scmp.lt.s32.totalorder %s22, 0
        %s175 = scalar_select %p174, %s22, 0
        %s176 = sadd.s32 %s175, %s173
        %s177 = smul.addr %s176, 8
        %s178 = scalar_lea.vmem %s0, %s177
        %v180 = vld [vmem:[%s178] sm:$0xff]
        %v181 = vlaneseq
        %v182 = vand.u32 %v181, 127
        %vm183 = vcmp.eq.s32.totalorder %v182, 0
        %v184 = vsel %vm183, %v180, 0
        %vm185 = vcmask 31744
        %v186 = vsel %vm185, %v184, 0
        %v187 = vand.u32 %v186, 65535
        %v188 = vshrl.u32 %v186, 16
        %v189 = vcvt.s32.f32 %v187
        %v190 = vcvt.s32.f32 %v188
        %191 = vadd.xlane.f32.xlu0 %v189
        %v192 = vpop.xlane.xlu0 %191
        %193 = vadd.xlane.f32.xlu0 %v190
        %v194 = vpop.xlane.xlu0 %193
        %v195 = vcvt.f32.s32 %v192
        %v196 = vcvt.f32.s32 %v194
        %v197 = vshll.u32 %v196, 16
        %v198 = vadd.s32 %v197, %v195
        %vm199 = vcmp.eq.s32.totalorder %v198, %v182
        %v200 = vsel %vm199, 1, 0
        %v201 = vcvt.s32.f32 %v200
        %v202 = vpack.c.bf16 %v201, %v201
        %v203 = vld [vmem:[#allocation3] sm:$0xf]
        %v204 = vld [vmem:[#allocation3 + $0x4] sm:$0xf]
        %v205 = vld [vmem:[#allocation3 + $0x8] sm:$0xf]
        %v206 = vld [vmem:[#allocation3 + $0xc] sm:$0xf]
        %v207 = vld [vmem:[#allocation3 + $0x10] sm:$0xf]
        %v208 = vld [vmem:[#allocation3 + $0x14] sm:$0xf]
        %v209 = vld [vmem:[#allocation3 + $0x18] sm:$0xf]
        %v210 = vld [vmem:[#allocation3 + $0x1c] sm:$0xf]
        %v211 = vld [vmem:[#allocation3 + $0x20] sm:$0xf]
        %v212 = vld [vmem:[#allocation3 + $0x24] sm:$0xf]
        %v213 = vld [vmem:[#allocation3 + $0x28] sm:$0xf]
        %v214 = vld [vmem:[#allocation3 + $0x2c] sm:$0xf]
        %v215 = vld [vmem:[#allocation3 + $0x30] sm:$0xf]
        %v216 = vld [vmem:[#allocation3 + $0x34] sm:$0xf]
        %v217 = vld [vmem:[#allocation3 + $0x38] sm:$0xf]
        %v218 = vld [vmem:[#allocation3 + $0x3c] sm:$0xf]
        %v235 = vunpack.c.l.b16 %v203
        %v236 = vunpack.c.l.b16 %v204
        %v237 = vunpack.c.l.b16 %v205
        %v238 = vunpack.c.l.b16 %v206
        %v239 = vunpack.c.l.b16 %v207
        %v240 = vunpack.c.l.b16 %v208
        %v241 = vunpack.c.l.b16 %v209
        %v242 = vunpack.c.l.b16 %v210
        %v243 = vunpack.c.l.b16 %v211
        %v244 = vunpack.c.l.b16 %v212
        %v245 = vunpack.c.l.b16 %v213
        %v246 = vunpack.c.l.b16 %v214
        %v247 = vunpack.c.l.b16 %v215
        %v248 = vunpack.c.l.b16 %v216
        %v249 = vunpack.c.l.b16 %v217
        %v250 = vunpack.c.l.b16 %v218
        %v251 = vpack.c.b16 %v236, %v235
        %v252 = vpack.c.b16 %v238, %v237
        %v253 = vpack.c.b16 %v240, %v239
        %v254 = vpack.c.b16 %v242, %v241
        %v255 = vpack.c.b16 %v244, %v243
        %v256 = vpack.c.b16 %v246, %v245
        %v257 = vpack.c.b16 %v248, %v247
        %v258 = vpack.c.b16 %v250, %v249
        %267 = vmatprep.subr.bf16.mxu0 0
        %268 = vmatpush1.bf16.msra.mxu0 %v258
        %269 = vmatprep.subr.bf16.mxu0 0
        %270 = vmatpush1.bf16.msra.mxu0 %v257
        %271 = vmatprep.subr.bf16.mxu0 0
        %272 = vmatpush1.bf16.msra.mxu0 %v256
        %273 = vmatprep.subr.bf16.mxu0 0
        %274 = vmatpush1.bf16.msra.mxu0 %v255
        %275 = vmatprep.subr.bf16.mxu0 0
        %276 = vmatpush1.bf16.msra.mxu0 %v254
        %277 = vmatprep.subr.bf16.mxu0 0
        %278 = vmatpush1.bf16.msra.mxu0 %v253
        %279 = vmatprep.subr.bf16.mxu0 0
        %280 = vmatpush1.bf16.msra.mxu0 %v252
        %281 = vmatprep.subr.bf16.mxu0 0
        %282 = vmatpush1.bf16.msra.mxu0 %v251
        %283 = vmatprep.subr.bf16.mxu0 0
        %284 = vmatpush2.bf16.msra.mxu0 0
        %285 = vmatprep.subr.bf16.mxu0 0
        %286 = vmatpush2.bf16.msra.mxu0 0
        %287 = vmatprep.subr.bf16.mxu0 0
        %288 = vmatpush2.bf16.msra.mxu0 0
        %289 = vmatprep.subr.bf16.mxu0 0
        %290 = vmatpush2.bf16.msra.mxu0 0
        %291 = vmatprep.subr.bf16.mxu0 0
        %292 = vmatpush2.bf16.msra.mxu0 0
        %293 = vmatprep.subr.bf16.mxu0 0
        %294 = vmatpush2.bf16.msra.mxu0 0
        %295 = vmatprep.subr.bf16.mxu0 0
        %296 = vmatpush2.bf16.msra.mxu0 0
        %297 = vmatprep.subr.bf16.mxu0 0
        %298 = vmatpush2.bf16.msra.mxu0 0
        %299 = vmatprep.mubr.bf16.mxu0 0
        %300 = vmatmul.mubr.bf16.gmra.mxu0 %v202
        %v301 = vpop.f32.mrf.mxu0
        %v302 = vadd.f32 0.0, %v301
        %v303 = vpop.f32.mrf.mxu0
        %v304 = vpop.f32.mrf.mxu0
        %v305 = vpop.f32.mrf.mxu0
        %306 = vdwg.mxu0
        %307 = vst [vmem:[#allocation2] sm:$0xff] %v302
        %vm308 = vcmp.eq.s32.totalorder %v182, 1
        %v309 = vsel %vm308, %v180, 0
        %v310 = vsel %vm185, %v309, 0
        %v311 = vand.u32 %v310, 65535
        %v312 = vshrl.u32 %v310, 16
        %v313 = vcvt.s32.f32 %v311
        %v314 = vcvt.s32.f32 %v312
        %315 = vadd.xlane.f32.xlu0 %v313
        %v316 = vpop.xlane.xlu0 %315
        %317 = vadd.xlane.f32.xlu0 %v314
        %v318 = vpop.xlane.xlu0 %317
        %v319 = vcvt.f32.s32 %v316
        %v320 = vcvt.f32.s32 %v318
        %v321 = vshll.u32 %v320, 16
        %v322 = vadd.s32 %v321, %v319
        %vm323 = vcmp.eq.s32.totalorder %v322, %v182
        %v324 = vsel %vm323, 1, 0
        %v325 = vcvt.s32.f32 %v324
        %v326 = vpack.c.bf16 %v325, %v325
        %s327 = scalar_lea.vmem [#allocation3], 64
        %v328 = vld [vmem:[%s327] sm:$0xf]
        %v329 = vld [vmem:[%s327 + $0x4] sm:$0xf]
        %v330 = vld [vmem:[%s327 + $0x8] sm:$0xf]
        %v331 = vld [vmem:[%s327 + $0xc] sm:$0xf]
        %v332 = vld [vmem:[%s327 + $0x10] sm:$0xf]
        %v333 = vld [vmem:[%s327 + $0x14] sm:$0xf]
        %v334 = vld [vmem:[%s327 + $0x18] sm:$0xf]
        %v335 = vld [vmem:[%s327 + $0x1c] sm:$0xf]
        %v336 = vld [vmem:[%s327 + $0x20] sm:$0xf]
        %v337 = vld [vmem:[%s327 + $0x24] sm:$0xf]
        %v338 = vld [vmem:[%s327 + $0x28] sm:$0xf]
        %v339 = vld [vmem:[%s327 + $0x2c] sm:$0xf]
        %v340 = vld [vmem:[%s327 + $0x30] sm:$0xf]
        %v341 = vld [vmem:[%s327 + $0x34] sm:$0xf]
        %v342 = vld [vmem:[%s327 + $0x38] sm:$0xf]
        %v343 = vld [vmem:[%s327 + $0x3c] sm:$0xf]
        %v360 = vunpack.c.l.b16 %v328
        %v361 = vunpack.c.l.b16 %v329
        %v362 = vunpack.c.l.b16 %v330
        %v363 = vunpack.c.l.b16 %v331
        %v364 = vunpack.c.l.b16 %v332
        %v365 = vunpack.c.l.b16 %v333
        %v366 = vunpack.c.l.b16 %v334
        %v367 = vunpack.c.l.b16 %v335
        %v368 = vunpack.c.l.b16 %v336
        %v369 = vunpack.c.l.b16 %v337
        %v370 = vunpack.c.l.b16 %v338
        %v371 = vunpack.c.l.b16 %v339
        %v372 = vunpack.c.l.b16 %v340
        %v373 = vunpack.c.l.b16 %v341
        %v374 = vunpack.c.l.b16 %v342
        %v375 = vunpack.c.l.b16 %v343
        %v376 = vpack.c.b16 %v361, %v360
        %v377 = vpack.c.b16 %v363, %v362
        %v378 = vpack.c.b16 %v365, %v364
        %v379 = vpack.c.b16 %v367, %v366
        %v380 = vpack.c.b16 %v369, %v368
        %v381 = vpack.c.b16 %v371, %v370
        %v382 = vpack.c.b16 %v373, %v372
        %v383 = vpack.c.b16 %v375, %v374
        %392 = vmatprep.subr.bf16.mxu0 0
        %393 = vmatpush1.bf16.msra.mxu0 %v383
        %394 = vmatprep.subr.bf16.mxu0 0
        %395 = vmatpush1.bf16.msra.mxu0 %v382
        %396 = vmatprep.subr.bf16.mxu0 0
        %397 = vmatpush1.bf16.msra.mxu0 %v381
        %398 = vmatprep.subr.bf16.mxu0 0
        %399 = vmatpush1.bf16.msra.mxu0 %v380
        %400 = vmatprep.subr.bf16.mxu0 0
        %401 = vmatpush1.bf16.msra.mxu0 %v379
        %402 = vmatprep.subr.bf16.mxu0 0
        %403 = vmatpush1.bf16.msra.mxu0 %v378
        %404 = vmatprep.subr.bf16.mxu0 0
        %405 = vmatpush1.bf16.msra.mxu0 %v377
        %406 = vmatprep.subr.bf16.mxu0 0
        %407 = vmatpush1.bf16.msra.mxu0 %v376
        %408 = vmatprep.subr.bf16.mxu0 0
        %409 = vmatpush2.bf16.msra.mxu0 0
        %410 = vmatprep.subr.bf16.mxu0 0
        %411 = vmatpush2.bf16.msra.mxu0 0
        %412 = vmatprep.subr.bf16.mxu0 0
        %413 = vmatpush2.bf16.msra.mxu0 0
        %414 = vmatprep.subr.bf16.mxu0 0
        %415 = vmatpush2.bf16.msra.mxu0 0
        %416 = vmatprep.subr.bf16.mxu0 0
        %417 = vmatpush2.bf16.msra.mxu0 0
        %418 = vmatprep.subr.bf16.mxu0 0
        %419 = vmatpush2.bf16.msra.mxu0 0
        %420 = vmatprep.subr.bf16.mxu0 0
        %421 = vmatpush2.bf16.msra.mxu0 0
        %422 = vmatprep.subr.bf16.mxu0 0
        %423 = vmatpush2.bf16.msra.mxu0 0
        %424 = vmatprep.mubr.bf16.mxu0 0
        %425 = vmatmul.mubr.bf16.gmra.mxu0 %v326
        %v426 = vpop.f32.mrf.mxu0
        %v427 = vadd.f32 0.0, %v426
        %v428 = vpop.f32.mrf.mxu0
        %v429 = vpop.f32.mrf.mxu0
        %v430 = vpop.f32.mrf.mxu0
        %431 = vdwg.mxu0
        %v432 = vld [vmem:[#allocation2] sm:$0xff]
        %v433 = vadd.f32 %v432, %v427
        %434 = vst [vmem:[#allocation2] sm:$0xff] %v433
        %vm435 = vcmp.eq.s32.totalorder %v182, 2
        %v436 = vsel %vm435, %v180, 0
        %v437 = vsel %vm185, %v436, 0
        %v438 = vand.u32 %v437, 65535
        %v439 = vshrl.u32 %v437, 16
        %v440 = vcvt.s32.f32 %v438
        %v441 = vcvt.s32.f32 %v439
        %442 = vadd.xlane.f32.xlu0 %v440
        %v443 = vpop.xlane.xlu0 %442
        %444 = vadd.xlane.f32.xlu0 %v441
        %v445 = vpop.xlane.xlu0 %444
        %v446 = vcvt.f32.s32 %v443
        %v447 = vcvt.f32.s32 %v445
        %v448 = vshll.u32 %v447, 16
        %v449 = vadd.s32 %v448, %v446
        %vm450 = vcmp.eq.s32.totalorder %v449, %v182
        %v451 = vsel %vm450, 1, 0
        %v452 = vcvt.s32.f32 %v451
        %v453 = vpack.c.bf16 %v452, %v452
        %s454 = scalar_lea.vmem [#allocation3], 128
        %v455 = vld [vmem:[%s454] sm:$0xf]
        %v456 = vld [vmem:[%s454 + $0x4] sm:$0xf]
        %v457 = vld [vmem:[%s454 + $0x8] sm:$0xf]
        %v458 = vld [vmem:[%s454 + $0xc] sm:$0xf]
        %v459 = vld [vmem:[%s454 + $0x10] sm:$0xf]
        %v460 = vld [vmem:[%s454 + $0x14] sm:$0xf]
        %v461 = vld [vmem:[%s454 + $0x18] sm:$0xf]
        %v462 = vld [vmem:[%s454 + $0x1c] sm:$0xf]
        %v463 = vld [vmem:[%s454 + $0x20] sm:$0xf]
        %v464 = vld [vmem:[%s454 + $0x24] sm:$0xf]
        %v465 = vld [vmem:[%s454 + $0x28] sm:$0xf]
        %v466 = vld [vmem:[%s454 + $0x2c] sm:$0xf]
        %v467 = vld [vmem:[%s454 + $0x30] sm:$0xf]
        %v468 = vld [vmem:[%s454 + $0x34] sm:$0xf]
        %v469 = vld [vmem:[%s454 + $0x38] sm:$0xf]
        %v470 = vld [vmem:[%s454 + $0x3c] sm:$0xf]
        %v487 = vunpack.c.l.b16 %v455
        %v488 = vunpack.c.l.b16 %v456
        %v489 = vunpack.c.l.b16 %v457
        %v490 = vunpack.c.l.b16 %v458
        %v491 = vunpack.c.l.b16 %v459
        %v492 = vunpack.c.l.b16 %v460
        %v493 = vunpack.c.l.b16 %v461
        %v494 = vunpack.c.l.b16 %v462
        %v495 = vunpack.c.l.b16 %v463
        %v496 = vunpack.c.l.b16 %v464
        %v497 = vunpack.c.l.b16 %v465
        %v498 = vunpack.c.l.b16 %v466
        %v499 = vunpack.c.l.b16 %v467
        %v500 = vunpack.c.l.b16 %v468
        %v501 = vunpack.c.l.b16 %v469
        %v502 = vunpack.c.l.b16 %v470
        %v503 = vpack.c.b16 %v488, %v487
        %v504 = vpack.c.b16 %v490, %v489
        %v505 = vpack.c.b16 %v492, %v491
        %v506 = vpack.c.b16 %v494, %v493
        %v507 = vpack.c.b16 %v496, %v495
        %v508 = vpack.c.b16 %v498, %v497
        %v509 = vpack.c.b16 %v500, %v499
        %v510 = vpack.c.b16 %v502, %v501
        %519 = vmatprep.subr.bf16.mxu0 0
        %520 = vmatpush1.bf16.msra.mxu0 %v510
        %521 = vmatprep.subr.bf16.mxu0 0
        %522 = vmatpush1.bf16.msra.mxu0 %v509
        %523 = vmatprep.subr.bf16.mxu0 0
        %524 = vmatpush1.bf16.msra.mxu0 %v508
        %525 = vmatprep.subr.bf16.mxu0 0
        %526 = vmatpush1.bf16.msra.mxu0 %v507
        %527 = vmatprep.subr.bf16.mxu0 0
        %528 = vmatpush1.bf16.msra.mxu0 %v506
        %529 = vmatprep.subr.bf16.mxu0 0
        %530 = vmatpush1.bf16.msra.mxu0 %v505
        %531 = vmatprep.subr.bf16.mxu0 0
        %532 = vmatpush1.bf16.msra.mxu0 %v504
        %533 = vmatprep.subr.bf16.mxu0 0
        %534 = vmatpush1.bf16.msra.mxu0 %v503
        %535 = vmatprep.subr.bf16.mxu0 0
        %536 = vmatpush2.bf16.msra.mxu0 0
        %537 = vmatprep.subr.bf16.mxu0 0
        %538 = vmatpush2.bf16.msra.mxu0 0
        %539 = vmatprep.subr.bf16.mxu0 0
        %540 = vmatpush2.bf16.msra.mxu0 0
        %541 = vmatprep.subr.bf16.mxu0 0
        %542 = vmatpush2.bf16.msra.mxu0 0
        %543 = vmatprep.subr.bf16.mxu0 0
        %544 = vmatpush2.bf16.msra.mxu0 0
        %545 = vmatprep.subr.bf16.mxu0 0
        %546 = vmatpush2.bf16.msra.mxu0 0
        %547 = vmatprep.subr.bf16.mxu0 0
        %548 = vmatpush2.bf16.msra.mxu0 0
        %549 = vmatprep.subr.bf16.mxu0 0
        %550 = vmatpush2.bf16.msra.mxu0 0
        %551 = vmatprep.mubr.bf16.mxu0 0
        %552 = vmatmul.mubr.bf16.gmra.mxu0 %v453
        %v553 = vpop.f32.mrf.mxu0
        %v554 = vadd.f32 0.0, %v553
        %v555 = vpop.f32.mrf.mxu0
        %v556 = vpop.f32.mrf.mxu0
        %v557 = vpop.f32.mrf.mxu0
        %558 = vdwg.mxu0
        %v559 = vld [vmem:[#allocation2] sm:$0xff]
        %v560 = vadd.f32 %v559, %v554
        %561 = vst [vmem:[#allocation2] sm:$0xff] %v560
        %vm562 = vcmp.eq.s32.totalorder %v182, 3
        %v563 = vsel %vm562, %v180, 0
        %v564 = vsel %vm185, %v563, 0
        %v565 = vand.u32 %v564, 65535
        %v566 = vshrl.u32 %v564, 16
        %v567 = vcvt.s32.f32 %v565
        %v568 = vcvt.s32.f32 %v566
        %569 = vadd.xlane.f32.xlu0 %v567
        %v570 = vpop.xlane.xlu0 %569
        %571 = vadd.xlane.f32.xlu0 %v568
        %v572 = vpop.xlane.xlu0 %571
        %v573 = vcvt.f32.s32 %v570
        %v574 = vcvt.f32.s32 %v572
        %v575 = vshll.u32 %v574, 16
        %v576 = vadd.s32 %v575, %v573
        %vm577 = vcmp.eq.s32.totalorder %v576, %v182
        %v578 = vsel %vm577, 1, 0
        %v579 = vcvt.s32.f32 %v578
        %v580 = vpack.c.bf16 %v579, %v579
        %s581 = scalar_lea.vmem [#allocation3], 192
        %v582 = vld [vmem:[%s581] sm:$0xf]
        %v583 = vld [vmem:[%s581 + $0x4] sm:$0xf]
        %v584 = vld [vmem:[%s581 + $0x8] sm:$0xf]
        %v585 = vld [vmem:[%s581 + $0xc] sm:$0xf]
        %v586 = vld [vmem:[%s581 + $0x10] sm:$0xf]
        %v587 = vld [vmem:[%s581 + $0x14] sm:$0xf]
        %v588 = vld [vmem:[%s581 + $0x18] sm:$0xf]
        %v589 = vld [vmem:[%s581 + $0x1c] sm:$0xf]
        %v590 = vld [vmem:[%s581 + $0x20] sm:$0xf]
        %v591 = vld [vmem:[%s581 + $0x24] sm:$0xf]
        %v592 = vld [vmem:[%s581 + $0x28] sm:$0xf]
        %v593 = vld [vmem:[%s581 + $0x2c] sm:$0xf]
        %v594 = vld [vmem:[%s581 + $0x30] sm:$0xf]
        %v595 = vld [vmem:[%s581 + $0x34] sm:$0xf]
        %v596 = vld [vmem:[%s581 + $0x38] sm:$0xf]
        %v597 = vld [vmem:[%s581 + $0x3c] sm:$0xf]
        %v614 = vunpack.c.l.b16 %v582
        %v615 = vunpack.c.l.b16 %v583
        %v616 = vunpack.c.l.b16 %v584
        %v617 = vunpack.c.l.b16 %v585
        %v618 = vunpack.c.l.b16 %v586
        %v619 = vunpack.c.l.b16 %v587
        %v620 = vunpack.c.l.b16 %v588
        %v621 = vunpack.c.l.b16 %v589
        %v622 = vunpack.c.l.b16 %v590
        %v623 = vunpack.c.l.b16 %v591
        %v624 = vunpack.c.l.b16 %v592
        %v625 = vunpack.c.l.b16 %v593
        %v626 = vunpack.c.l.b16 %v594
        %v627 = vunpack.c.l.b16 %v595
        %v628 = vunpack.c.l.b16 %v596
        %v629 = vunpack.c.l.b16 %v597
        %v630 = vpack.c.b16 %v615, %v614
        %v631 = vpack.c.b16 %v617, %v616
        %v632 = vpack.c.b16 %v619, %v618
        %v633 = vpack.c.b16 %v621, %v620
        %v634 = vpack.c.b16 %v623, %v622
        %v635 = vpack.c.b16 %v625, %v624
        %v636 = vpack.c.b16 %v627, %v626
        %v637 = vpack.c.b16 %v629, %v628
        %646 = vmatprep.subr.bf16.mxu0 0
        %647 = vmatpush1.bf16.msra.mxu0 %v637
        %648 = vmatprep.subr.bf16.mxu0 0
        %649 = vmatpush1.bf16.msra.mxu0 %v636
        %650 = vmatprep.subr.bf16.mxu0 0
        %651 = vmatpush1.bf16.msra.mxu0 %v635
        %652 = vmatprep.subr.bf16.mxu0 0
        %653 = vmatpush1.bf16.msra.mxu0 %v634
        %654 = vmatprep.subr.bf16.mxu0 0
        %655 = vmatpush1.bf16.msra.mxu0 %v633
        %656 = vmatprep.subr.bf16.mxu0 0
        %657 = vmatpush1.bf16.msra.mxu0 %v632
        %658 = vmatprep.subr.bf16.mxu0 0
        %659 = vmatpush1.bf16.msra.mxu0 %v631
        %660 = vmatprep.subr.bf16.mxu0 0
        %661 = vmatpush1.bf16.msra.mxu0 %v630
        %662 = vmatprep.subr.bf16.mxu0 0
        %663 = vmatpush2.bf16.msra.mxu0 0
        %664 = vmatprep.subr.bf16.mxu0 0
        %665 = vmatpush2.bf16.msra.mxu0 0
        %666 = vmatprep.subr.bf16.mxu0 0
        %667 = vmatpush2.bf16.msra.mxu0 0
        %668 = vmatprep.subr.bf16.mxu0 0
        %669 = vmatpush2.bf16.msra.mxu0 0
        %670 = vmatprep.subr.bf16.mxu0 0
        %671 = vmatpush2.bf16.msra.mxu0 0
        %672 = vmatprep.subr.bf16.mxu0 0
        %673 = vmatpush2.bf16.msra.mxu0 0
        %674 = vmatprep.subr.bf16.mxu0 0
        %675 = vmatpush2.bf16.msra.mxu0 0
        %676 = vmatprep.subr.bf16.mxu0 0
        %677 = vmatpush2.bf16.msra.mxu0 0
        %678 = vmatprep.mubr.bf16.mxu0 0
        %679 = vmatmul.mubr.bf16.gmra.mxu0 %v580
        %v680 = vpop.f32.mrf.mxu0
        %v681 = vadd.f32 0.0, %v680
        %v682 = vpop.f32.mrf.mxu0
        %v683 = vpop.f32.mrf.mxu0
        %v684 = vpop.f32.mrf.mxu0
        %685 = vdwg.mxu0
        %v686 = vld [vmem:[#allocation2] sm:$0xff]
        %v687 = vadd.f32 %v686, %v681
        %688 = vst [vmem:[#allocation2] sm:$0xff] %v687
        %v689 = vld [vmem:[#allocation2] sm:$0xff]
        %690 = vst [vmem:[%s171] sm:$0xff] %v689
        %s691 = sand.u32 %s88, 1
        %s692 = scalar_lea.sflag [#allocation5], %s691
        %s693 = sand.u32 %s88, 1
        %s694 = smul.addr %s693, 8
        %s695 = scalar_lea.vmem [#allocation6], %s694
        // Predicated region
        $region33: #{tpu_custom_call.1} parent=27 // pred_check
          %p696 = pneg %p98
        $region34: #{tpu_custom_call.1} parent=27 // pred_check_branch
          %698 = sbr.rel (%p696) target = $region36
        $region35: #{tpu_custom_call.1} parent=27 // pred_region
          %s700 = ssub.s32 128, 128
          %701 = vsyncadd %s692, %s700
          %s702 = sadd.s32 %s22, %s21
          %s703 = smul.addr %s702, 128
          %s704 = scalar_lea.hbm %s2, %s703
          %s706 = sshll.u32 %s695, 4
          %s707 = int_to_ptr.vmem [resolvable:$true] %s706
          %709 = dma.vmem_to_hbm [thread:$0]  %s707, 128, %s704, %s692
        $region36: #{tpu_custom_call.1} parent=27 // pred_fallthru
          _
      $region28: #{tpu_custom_call.1} parent=5 // pred_fallthru
        _
      %p710 = scmp.le.s32.totalorder 2, %s12
      // Predicated region
      $region37: #{tpu_custom_call.1} parent=5 // pred_check
        %p711 = pneg %p710
      $region38: #{tpu_custom_call.1} parent=5 // pred_check_branch
        %713 = sbr.rel (%p711) target = $region40
      $region39: #{tpu_custom_call.1} parent=5 // pred_region
        %s714 = ssub.s32 %s12, 2
        // Predicated region
        $region41: #{tpu_custom_call.1} parent=39 // pred_check
          %p715 = pneg %p104
        $region42: #{tpu_custom_call.1} parent=39 // pred_check_branch
          %717 = sbr.rel (%p715) target = $region44
        $region43: #{tpu_custom_call.1} parent=39 // pred_region
          %s718 = sand.u32 %s89, 1
          %s719 = scalar_lea.sflag [#allocation5], %s718
          %s720 = sand.u32 %s89, 1
          %s721 = smul.addr %s720, 8
          %s722 = scalar_lea.vmem [#allocation6], %s721
          %723 = dma.done %s719, 128
        $region44: #{tpu_custom_call.1} parent=39 // pred_fallthru
          _
      $region40: #{tpu_custom_call.1} parent=5 // pred_fallthru
        _
    $region6: #{tpu_custom_call.1} parent=1 // loop_footer
      %s16 = sadd.s32 1, %s12
    $region7: #{tpu_custom_call.1} parent=1 // loop_footer_branch
      %11 = sbr.rel target = $region3
    $region8: #{tpu_custom_call.1} parent=1 // loop_exit
      _
    %724 = vsyncpa [#allocation4], 1
    %s725 = scalar_lea.sflag [#allocation4], 1
    %726 = vsyncpa %s725, 1
    %727 = vsyncpa [#allocation5], 1
    %s728 = scalar_lea.sflag [#allocation5], 1
    %729 = vsyncpa %s728, 1

</llo_original>
